<compile_context>
chip_gen: v7x
topology: tpu7x:2x2x1
jax: 0.10.0
libtpu: 0.0.40
codegen_flags: <defaults>
</compile_context>

<pallas_src>
import math

import jax
import jax.numpy as jnp
from jax.experimental import pallas as pl
from jax.experimental.pallas import tpu as pltpu


def _make_kernel(inv_t):
    """Builds the kernel with the static 1/T constant baked in (for the mean)."""

    def kernel(a_ref, x_ref, wv_ref, bv_ref, wq_ref, o_ref,
               wsum_acc, wtot_acc, sum_acc, max_acc):
        # a_ref:  (1,)        SMEM scalar  a_eff = 20 * exp(-(bk @ q))
        # x_ref:  (BB, TT, D) input tile, native dtype
        # wv_ref: (D, D)      value_extract weight, pre-transposed (y = x @ Wv^T)
        # bv_ref: (1, D)
        # wq_ref: (1, D)      folded key-projection/query row (wk^T @ q)^T
        # o_ref:  (BB, 1, 4D) lane-dense output block [atn | sum | max | mean]
        t = pl.program_id(1)

        @pl.when(t == 0)
        def _():
            wsum_acc[...] = jnp.zeros_like(wsum_acc)
            wtot_acc[...] = jnp.zeros_like(wtot_acc)
            sum_acc[...] = jnp.zeros_like(sum_acc)
            max_acc[...] = jnp.full_like(max_acc, -jnp.inf)   # running max init

        x = x_ref[...].astype(jnp.float32)                     # (BB, TT, D)

        # scores = x @ wq_eff  (key projection folded into the query), done as a
        # VPU multiply + lane reduce instead of an N=1 MXU matmul.
        scores = jnp.sum(x * wq_ref[...], axis=-1, keepdims=True)   # (BB, TT, 1)

        # logistic(s + bq) = 1 / (1 + 20*e^{-bq} * e^{-s});  a_eff = 20*e^{-bq}.
        w = pl.reciprocal(1.0 + a_ref[0] * jnp.exp(-scores), approx=True)

        wsum_acc[...] += jnp.sum(x * w, axis=1)                # (BB, D)
        wtot_acc[...] += jnp.sum(w, axis=1)                    # (BB, 1)
        sum_acc[...] += jnp.sum(x, axis=1)                     # (BB, D)
        max_acc[...] = jnp.maximum(max_acc[...], jnp.max(x, axis=1))

        @pl.when(t == pl.num_programs(1) - 1)
        def _():
            # Deferred value projection: one tiny MXU matmul on the reduced tensor.
            atn = (jnp.dot(wsum_acc[...], wv_ref[...],
                           preferred_element_type=jnp.float32)
                   + wtot_acc[...] * bv_ref[...])              # (BB, D)
            s = sum_acc[...]
            out = jnp.concatenate([atn, s, max_acc[...], s * inv_t], axis=-1)
            o_ref[:, 0, :] = out.astype(o_ref.dtype)           # one lane-dense store

    return kernel


def _tpu_vmem_and_cores():
    """Physical VMEM bytes and (approximate) TensorCore count per chip."""
    vmem = 64 * 1024 * 1024   # conservative default (v7x per-TC VMEM)
    cores = 1
    try:
        vmem = int(pltpu.get_tpu_info().vmem_capacity_bytes)
    except Exception:
        pass
    try:
        kind = jax.devices()[0].device_kind.lower()
        if ("v7" in kind) or ("v4" in kind) or ("v5p" in kind):
            cores = 2   # megacore: 'parallel' grid axes shard across TCs
    except Exception:
        pass
    return vmem, cores


def _block_vmem_bytes(bb, tt, D, x_itemsize):
    """Rough VMEM footprint of one grid step (double-buffered inputs/outputs)."""
    x_bytes = 2 * bb * tt * D * x_itemsize        # x tile, double-buffered
    wv_bytes = 2 * D * D * 4                      # Wv^T (fp32)
    out_bytes = 2 * bb * 4 * D * 4                # output block
    small = 2 * (2 * D * 4)                       # bv, wq_eff
    scratch = 3 * bb * D * 4 + bb * 4             # resident accumulators
    return x_bytes + wv_bytes + out_bytes + small + scratch


def _pick_tiles(B, T, D, x_itemsize, vmem_cap, n_cores):
    """Largest (BB, TT) divisor tiles fitting ~1/3 of physical VMEM."""
    budget = max(vmem_cap // 3, 1 << 20)

    # T tiles: divisors of T that are multiples of 8 (sublane), plus T itself
    # (a full-extent block needs no 8-divisibility).
    tts = sorted({t for t in range(8, T + 1, 8) if T % t == 0} | {T}, reverse=True)

    # Batch tiles: divisors of B.  Only reserve >= 2 grid steps along the
    # parallel batch axis on multi-TensorCore chips (megacore sharding).
    bbs = [b for b in range(B, 0, -1) if B % b == 0]
    if n_cores > 1 and B > 1:
        bbs = [b for b in bbs if B // b >= 2] or [1]

    for bb in bbs:
        for tt in tts:
            if _block_vmem_bytes(bb, tt, D, x_itemsize) <= budget:
                return bb, tt
    return bbs[-1], min(tts)


def all_agg_pallas(x, wk, bk, wv, bv, query):
    """x: (B, T, D); wk: (2D, D); bk: (2D,); wv: (D, D); bv: (D,); query: (2D, 1)."""
    B, T, D = x.shape
    f32 = jnp.float32

    # Parameter preparation (glue, done once outside the kernel).
    wv_t = wv.T.astype(f32)                                         # (D, D)
    bv2 = bv.reshape(1, D).astype(f32)                              # (1, D)
    wq_eff = (wk.astype(f32).T @ query.astype(f32)).reshape(1, D)   # (1, D)
    bq_eff = (bk.astype(f32) @ query.astype(f32)).reshape(())       # scalar
    a_eff = (20.0 * jnp.exp(-bq_eff)).reshape(1).astype(f32)        # (1,) SMEM scalar

    vmem_cap, n_cores = _tpu_vmem_and_cores()
    BB, TT = _pick_tiles(B, T, D, jnp.dtype(x.dtype).itemsize, vmem_cap, n_cores)
    grid = (B // BB, T // TT)

    est = _block_vmem_bytes(BB, TT, D, jnp.dtype(x.dtype).itemsize)
    vmem_limit = int(min(vmem_cap * 9 // 10, max(2 * est, 32 * 1024 * 1024)))

    out = pl.pallas_call(
        _make_kernel(1.0 / T),
        out_shape=jax.ShapeDtypeStruct((B, 1, 4 * D), x.dtype),
        grid_spec=pltpu.PrefetchScalarGridSpec(
            num_scalar_prefetch=0,
            grid=grid,
            in_specs=[
                pl.BlockSpec(memory_space=pltpu.MemorySpace.SMEM),    # a_eff
                pl.BlockSpec((BB, TT, D), lambda b, t: (b, t, 0)),    # x (native dtype)
                pl.BlockSpec((D, D), lambda b, t: (0, 0)),            # Wv^T
                pl.BlockSpec((1, D), lambda b, t: (0, 0)),            # bv
                pl.BlockSpec((1, D), lambda b, t: (0, 0)),            # wq_eff
            ],
            out_specs=pl.BlockSpec((BB, 1, 4 * D), lambda b, t: (b, 0, 0)),
            scratch_shapes=[
                pltpu.VMEM((BB, D), jnp.float32),   # running sum_t w_t * x_t
                pltpu.VMEM((BB, 1), jnp.float32),   # running sum_t w_t
                pltpu.VMEM((BB, D), jnp.float32),   # running sum_t x_t
                pltpu.VMEM((BB, D), jnp.float32),   # running max_t x_t
            ],
        ),
        compiler_params=pltpu.CompilerParams(
            dimension_semantics=("parallel", "arbitrary"),
            vmem_limit_bytes=vmem_limit,
        ),
    )(a_eff, x, wv_t, bv2, wq_eff)

    # (B, 1, 4D) -> (B, 4*D), matching torch.cat([atn, sum, max, mean], axis=1).
    return out.reshape(B, 4 * D)


def all_agg_reference(x, wk, bk, wv, bv, query):
    """Pure-JAX reference of the PyTorch forward."""
    value = x @ wv.T + bv                                      # (B, T, D)
    keys = x @ wk.T + bk                                       # (B, T, 2D)
    scores = jnp.einsum('btj,jk->btk', keys, query)            # (B, T, 1)
    weights = 1.0 / (1.0 + 20.0 * jnp.exp(-scores))
    atn = jnp.einsum('btj,btk->bjk', value, weights)[..., 0]   # (B, D)
    return jnp.concatenate(
        [atn, jnp.sum(x, axis=1), jnp.max(x, axis=1), jnp.mean(x, axis=1)],
        axis=1)


if __name__ == "__main__":
    B, T, D = 2, 8, 32        # batch, seq, model_dim
    key = jax.random.PRNGKey(0)
    kx, kwk, kbk, kwv, kbv, kq = jax.random.split(key, 6)

    x = jax.random.normal(kx, (B, T, D), dtype=jnp.float32)

    # key_extract: Linear(D, 2D)  -> weight (2D, D), bias (2D,)
    bound_k = 1.0 / math.sqrt(D)
    wk = jax.random.uniform(kwk, (2 * D, D), minval=-bound_k, maxval=bound_k, dtype=jnp.float32)
    bk = jax.random.uniform(kbk, (2 * D,), minval=-bound_k, maxval=bound_k, dtype=jnp.float32)

    # value_extract: Linear(D, D) -> weight (D, D), bias (D,)
    wv = jax.random.uniform(kwv, (D, D), minval=-bound_k, maxval=bound_k, dtype=jnp.float32)
    bv = jax.random.uniform(kbv, (D,), minval=-bound_k, maxval=bound_k, dtype=jnp.float32)

    # query: (key_dim, nheads) = (2D, 1), kaiming-uniform-ish deterministic init
    bound_q = math.sqrt(6.0 / (2 * D)) / math.sqrt(1 + 5.0)
    query = jax.random.uniform(kq, (2 * D, 1), minval=-bound_q, maxval=bound_q, dtype=jnp.float32)

    out = all_agg_pallas(x, wk, bk, wv, bv, query)
    out = jax.block_until_ready(out)

    ref = all_agg_reference(x, wk, bk, wv, bv, query)
    assert out.shape == (B, 4 * D)
    # Folded key projection, deferred value projection, and the approximate
    # EUP reciprocal change fp32 rounding slightly -> loosened tolerance.
    assert jnp.allclose(out, ref, atol=1e-2, rtol=1e-2), "mismatch vs reference"

    print("KERNEL_OK")
</pallas_src>

<mosaic_0001>
module attributes {stable_mosaic.version = 11 : i64} {
  func.func @kernel(%arg0: i32, %arg1: i32, %arg2: memref<1xf32, #tpu.memory_space<smem>>, %arg3: memref<2x8x32xf32, #tpu.memory_space<vmem>>, %arg4: memref<32x32xf32, #tpu.memory_space<vmem>>, %arg5: memref<1x32xf32, #tpu.memory_space<vmem>>, %arg6: memref<1x32xf32, #tpu.memory_space<vmem>>, %arg7: memref<2x1x128xf32, #tpu.memory_space<vmem>>, %arg8: memref<2x32xf32, #tpu.memory_space<vmem>>, %arg9: memref<2x1xf32, #tpu.memory_space<vmem>>, %arg10: memref<2x32xf32, #tpu.memory_space<vmem>>, %arg11: memref<2x32xf32, #tpu.memory_space<vmem>>) attributes {dimension_semantics = [#tpu.dimension_semantics<parallel>, #tpu.dimension_semantics<arbitrary>], iteration_bounds = array<i64: 1, 1>, scalar_prefetch = 0 : i64, scratch_operands = 4 : i64, tpu.core_type = #tpu.core_type<tc>, window_params = [{transform_indices = @transform_0, window_bounds = array<i64: 1>}, {transform_indices = @transform_1, window_bounds = array<i64: 2, 8, 32>}, {pipeline_mode = #tpu.pipeline_mode<synchronous>, transform_indices = @transform_2, window_bounds = array<i64: 32, 32>}, {pipeline_mode = #tpu.pipeline_mode<synchronous>, transform_indices = @transform_3, window_bounds = array<i64: 1, 32>}, {pipeline_mode = #tpu.pipeline_mode<synchronous>, transform_indices = @transform_4, window_bounds = array<i64: 1, 32>}, {transform_indices = @transform_5, window_bounds = array<i64: 2, 1, 128>}]} {
    %c0_i32 = arith.constant 0 : i32
    %0 = arith.cmpi eq, %arg1, %c0_i32 : i32
    %1 = arith.extui %0 : i1 to i32
    %c0_i32_0 = arith.constant 0 : i32
    %2 = arith.cmpi ne, %1, %c0_i32_0 : i32
    scf.if %2 {
      %cst_30 = arith.constant 0.000000e+00 : f32
      %40 = vector.broadcast %cst_30 : f32 to vector<2x32xf32>
      %c0_31 = arith.constant 0 : index
      %c0_32 = arith.constant 0 : index
      %41 = vector.load %arg8[%c0_31, %c0_32] : memref<2x32xf32, #tpu.memory_space<vmem>>, vector<2x32xf32>
      tpu.vector_store %arg8[%c0_31, %c0_32], %40 {strides = array<i32>} : memref<2x32xf32, #tpu.memory_space<vmem>>, vector<2x32xf32>,
      %cst_33 = arith.constant 0.000000e+00 : f32
      %42 = vector.broadcast %cst_33 : f32 to vector<2x1xf32>
      %c0_34 = arith.constant 0 : index
      %c0_35 = arith.constant 0 : index
      %43 = vector.load %arg9[%c0_34, %c0_35] : memref<2x1xf32, #tpu.memory_space<vmem>>, vector<2x1xf32>
      tpu.vector_store %arg9[%c0_34, %c0_35], %42 {strides = array<i32>} : memref<2x1xf32, #tpu.memory_space<vmem>>, vector<2x1xf32>,
      %cst_36 = arith.constant 0.000000e+00 : f32
      %44 = vector.broadcast %cst_36 : f32 to vector<2x32xf32>
      %c0_37 = arith.constant 0 : index
      %c0_38 = arith.constant 0 : index
      %45 = vector.load %arg10[%c0_37, %c0_38] : memref<2x32xf32, #tpu.memory_space<vmem>>, vector<2x32xf32>
      tpu.vector_store %arg10[%c0_37, %c0_38], %44 {strides = array<i32>} : memref<2x32xf32, #tpu.memory_space<vmem>>, vector<2x32xf32>,
      %cst_39 = arith.constant 0xFF800000 : f32
      %46 = vector.broadcast %cst_39 : f32 to vector<2x32xf32>
      %c0_40 = arith.constant 0 : index
      %c0_41 = arith.constant 0 : index
      %47 = vector.load %arg11[%c0_40, %c0_41] : memref<2x32xf32, #tpu.memory_space<vmem>>, vector<2x32xf32>
      tpu.vector_store %arg11[%c0_40, %c0_41], %46 {strides = array<i32>} : memref<2x32xf32, #tpu.memory_space<vmem>>, vector<2x32xf32>,
    } else {
    }
    %c0 = arith.constant 0 : index
    %c0_1 = arith.constant 0 : index
    %c0_2 = arith.constant 0 : index
    %3 = vector.load %arg3[%c0, %c0_1, %c0_2] : memref<2x8x32xf32, #tpu.memory_space<vmem>>, vector<2x8x32xf32>
    %c0_3 = arith.constant 0 : index
    %c0_4 = arith.constant 0 : index
    %4 = vector.load %arg6[%c0_3, %c0_4] : memref<1x32xf32, #tpu.memory_space<vmem>>, vector<1x32xf32>
    %5 = vector.shape_cast %4 : vector<1x32xf32> to vector<1x1x32xf32>
    %6 = vector.broadcast %5 : vector<1x1x32xf32> to vector<2x8x32xf32>
    %7 = arith.mulf %3, %6 : vector<2x8x32xf32>
    %cst = arith.constant dense<0.000000e+00> : vector<2x8xf32>
    %8 = vector.multi_reduction <add>, %7, %cst [2] : vector<2x8x32xf32> to vector<2x8xf32>
    %9 = vector.shape_cast %8 : vector<2x8xf32> to vector<2x8x1xf32>
    %c0_5 = arith.constant 0 : index
    %10 = memref.load %arg2[%c0_5] : memref<1xf32, #tpu.memory_space<smem>>
    %cst_6 = arith.constant 0.000000e+00 : f32
    %11 = vector.broadcast %cst_6 : f32 to vector<2x8x1xf32>
    %12 = arith.subf %11, %9 : vector<2x8x1xf32>
    %13 = math.exp %12 : vector<2x8x1xf32>
    %14 = vector.broadcast %10 : f32 to vector<2x8x1xf32>
    %15 = arith.mulf %14, %13 : vector<2x8x1xf32>
    %cst_7 = arith.constant 1.000000e+00 : f32
    %16 = vector.broadcast %cst_7 : f32 to vector<2x8x1xf32>
    %17 = arith.addf %16, %15 : vector<2x8x1xf32>
    %18 = tpu.reciprocal %17 {approx = true} : vector<2x8x1xf32> -> vector<2x8x1xf32>
    %c0_8 = arith.constant 0 : index
    %c0_9 = arith.constant 0 : index
    %19 = vector.load %arg8[%c0_8, %c0_9] : memref<2x32xf32, #tpu.memory_space<vmem>>, vector<2x32xf32>
    %20 = vector.broadcast %18 : vector<2x8x1xf32> to vector<2x8x32xf32>
    %21 = arith.mulf %3, %20 : vector<2x8x32xf32>
    %cst_10 = arith.constant dense<0.000000e+00> : vector<2x32xf32>
    %22 = vector.multi_reduction <add>, %21, %cst_10 [1] : vector<2x8x32xf32> to vector<2x32xf32>
    %23 = arith.addf %19, %22 : vector<2x32xf32>
    %c0_11 = arith.constant 0 : index
    %c0_12 = arith.constant 0 : index
    %24 = vector.load %arg8[%c0_11, %c0_12] : memref<2x32xf32, #tpu.memory_space<vmem>>, vector<2x32xf32>
    tpu.vector_store %arg8[%c0_11, %c0_12], %23 {strides = array<i32>} : memref<2x32xf32, #tpu.memory_space<vmem>>, vector<2x32xf32>,
    %c0_13 = arith.constant 0 : index
    %c0_14 = arith.constant 0 : index
    %25 = vector.load %arg9[%c0_13, %c0_14] : memref<2x1xf32, #tpu.memory_space<vmem>>, vector<2x1xf32>
    %cst_15 = arith.constant dense<0.000000e+00> : vector<2x1xf32>
    %26 = vector.multi_reduction <add>, %18, %cst_15 [1] : vector<2x8x1xf32> to vector<2x1xf32>
    %27 = arith.addf %25, %26 : vector<2x1xf32>
    %c0_16 = arith.constant 0 : index
    %c0_17 = arith.constant 0 : index
    %28 = vector.load %arg9[%c0_16, %c0_17] : memref<2x1xf32, #tpu.memory_space<vmem>>, vector<2x1xf32>
    tpu.vector_store %arg9[%c0_16, %c0_17], %27 {strides = array<i32>} : memref<2x1xf32, #tpu.memory_space<vmem>>, vector<2x1xf32>,
    %c0_18 = arith.constant 0 : index
    %c0_19 = arith.constant 0 : index
    %29 = vector.load %arg10[%c0_18, %c0_19] : memref<2x32xf32, #tpu.memory_space<vmem>>, vector<2x32xf32>
    %cst_20 = arith.constant dense<0.000000e+00> : vector<2x32xf32>
    %30 = vector.multi_reduction <add>, %3, %cst_20 [1] : vector<2x8x32xf32> to vector<2x32xf32>
    %31 = arith.addf %29, %30 : vector<2x32xf32>
    %c0_21 = arith.constant 0 : index
    %c0_22 = arith.constant 0 : index
    %32 = vector.load %arg10[%c0_21, %c0_22] : memref<2x32xf32, #tpu.memory_space<vmem>>, vector<2x32xf32>
    tpu.vector_store %arg10[%c0_21, %c0_22], %31 {strides = array<i32>} : memref<2x32xf32, #tpu.memory_space<vmem>>, vector<2x32xf32>,
    %c0_23 = arith.constant 0 : index
    %c0_24 = arith.constant 0 : index
    %33 = vector.load %arg11[%c0_23, %c0_24] : memref<2x32xf32, #tpu.memory_space<vmem>>, vector<2x32xf32>
    %cst_25 = arith.constant dense<0xFF800000> : vector<2x32xf32>
    %34 = vector.multi_reduction <maximumf>, %3, %cst_25 [1] : vector<2x8x32xf32> to vector<2x32xf32>
    %35 = arith.maximumf %33, %34 : vector<2x32xf32>
    %c0_26 = arith.constant 0 : index
    %c0_27 = arith.constant 0 : index
    %36 = vector.load %arg11[%c0_26, %c0_27] : memref<2x32xf32, #tpu.memory_space<vmem>>, vector<2x32xf32>
    tpu.vector_store %arg11[%c0_26, %c0_27], %35 {strides = array<i32>} : memref<2x32xf32, #tpu.memory_space<vmem>>, vector<2x32xf32>,
    %c0_i32_28 = arith.constant 0 : i32
    %37 = arith.cmpi eq, %arg1, %c0_i32_28 : i32
    %38 = arith.extui %37 : i1 to i32
    %c0_i32_29 = arith.constant 0 : i32
    %39 = arith.cmpi ne, %38, %c0_i32_29 : i32
    scf.if %39 {
      %c0_30 = arith.constant 0 : index
      %c0_31 = arith.constant 0 : index
      %40 = vector.load %arg8[%c0_30, %c0_31] : memref<2x32xf32, #tpu.memory_space<vmem>>, vector<2x32xf32>
      %c0_32 = arith.constant 0 : index
      %c0_33 = arith.constant 0 : index
      %41 = vector.load %arg4[%c0_32, %c0_33] : memref<32x32xf32, #tpu.memory_space<vmem>>, vector<32x32xf32>
      %cst_34 = arith.constant dense<0.000000e+00> : vector<2x32xf32>
      %42 = tpu.matmul %40, %41, %cst_34 {dimension_numbers = #tpu.dot_dimension_numbers<[1], [0], [0], [1], [0, 0, 1, 1], [], []>} : vector<2x32xf32>, vector<32x32xf32>, vector<2x32xf32> -> vector<2x32xf32>
      %c0_35 = arith.constant 0 : index
      %c0_36 = arith.constant 0 : index
      %43 = vector.load %arg9[%c0_35, %c0_36] : memref<2x1xf32, #tpu.memory_space<vmem>>, vector<2x1xf32>
      %c0_37 = arith.constant 0 : index
      %c0_38 = arith.constant 0 : index
      %44 = vector.load %arg5[%c0_37, %c0_38] : memref<1x32xf32, #tpu.memory_space<vmem>>, vector<1x32xf32>
      %45 = vector.broadcast %43 : vector<2x1xf32> to vector<2x32xf32>
      %46 = vector.broadcast %44 : vector<1x32xf32> to vector<2x32xf32>
      %47 = arith.mulf %45, %46 : vector<2x32xf32>
      %48 = arith.addf %42, %47 : vector<2x32xf32>
      %c0_39 = arith.constant 0 : index
      %c0_40 = arith.constant 0 : index
      %49 = vector.load %arg10[%c0_39, %c0_40] : memref<2x32xf32, #tpu.memory_space<vmem>>, vector<2x32xf32>
      %c0_41 = arith.constant 0 : index
      %c0_42 = arith.constant 0 : index
      %50 = vector.load %arg11[%c0_41, %c0_42] : memref<2x32xf32, #tpu.memory_space<vmem>>, vector<2x32xf32>
      %cst_43 = arith.constant 1.250000e-01 : f32
      %51 = vector.broadcast %cst_43 : f32 to vector<2x32xf32>
      %52 = arith.mulf %49, %51 : vector<2x32xf32>
      %53 = tpu.concatenate %48, %49, %50, %52 in 1 : vector<2x32xf32>, vector<2x32xf32>, vector<2x32xf32>, vector<2x32xf32> -> vector<2x128xf32>
      %c0_44 = arith.constant 0 : index
      %c0_45 = arith.constant 0 : index
      %c0_46 = arith.constant 0 : index
      %54 = vector.load %arg7[%c0_44, %c0_45, %c0_46] : memref<2x1x128xf32, #tpu.memory_space<vmem>>, vector<2x1x128xf32>
      %55 = vector.shape_cast %54 : vector<2x1x128xf32> to vector<2x128xf32>
      %56 = vector.shape_cast %53 : vector<2x128xf32> to vector<2x1x128xf32>
      tpu.vector_store %arg7[%c0_44, %c0_45, %c0_46], %56 {strides = array<i32>} : memref<2x1x128xf32, #tpu.memory_space<vmem>>, vector<2x1x128xf32>,
    } else {
    }
    return
  }
  func.func @transform_0(%arg0: i32, %arg1: i32) -> i32 {
    %c0_i32 = arith.constant 0 : i32
    %c0_i32_0 = arith.constant 0 : i32
    return %c0_i32 : i32
  }
  func.func @transform_1(%arg0: i32, %arg1: i32) -> (i32, i32, i32) {
    %c0_i32 = arith.constant 0 : i32
    %c0_i32_0 = arith.constant 0 : i32
    return %arg0, %arg1, %c0_i32 : i32, i32, i32
  }
  func.func @transform_2(%arg0: i32, %arg1: i32) -> (i32, i32) {
    %c0_i32 = arith.constant 0 : i32
    %c0_i32_0 = arith.constant 0 : i32
    %c0_i32_1 = arith.constant 0 : i32
    return %c0_i32, %c0_i32_0 : i32, i32
  }
  func.func @transform_3(%arg0: i32, %arg1: i32) -> (i32, i32) {
    %c0_i32 = arith.constant 0 : i32
    %c0_i32_0 = arith.constant 0 : i32
    %c0_i32_1 = arith.constant 0 : i32
    return %c0_i32, %c0_i32_0 : i32, i32
  }
  func.func @transform_4(%arg0: i32, %arg1: i32) -> (i32, i32) {
    %c0_i32 = arith.constant 0 : i32
    %c0_i32_0 = arith.constant 0 : i32
    %c0_i32_1 = arith.constant 0 : i32
    return %c0_i32, %c0_i32_0 : i32, i32
  }
  func.func @transform_5(%arg0: i32, %arg1: i32) -> (i32, i32, i32) {
    %c0_i32 = arith.constant 0 : i32
    %c0_i32_0 = arith.constant 0 : i32
    %c0_i32_1 = arith.constant 0 : i32
    return %arg0, %c0_i32, %c0_i32_0 : i32, i32, i32
  }
}

</mosaic_0001>

<llo_original>
// kernel: tpu_custom_call.1
$region0: #{tpu_custom_call.1}
  #allocation0 [shape = 'u32[]', space=smem, size = 0x4, offset = 0x4, fixed_abs, tag = 'smem constant byte address 0x4 - core index']
  #allocation1 [shape = 'u32[144,128]{1,0:T(1,128)}', space=vmem, size = 0x12000, scoped, tag = 'internal scratch']
  #allocation2 [shape = 'f32[2,32]{1,0:T(2,128)}', space=vmem, size = 0x400, scoped, tag = 'scratch operand']
  #allocation3 [shape = 'f32[2,1]{1,0:T(2,128)}', space=vmem, size = 0x400, scoped, tag = 'scratch operand']
  #allocation4 [shape = 'f32[2,32]{1,0:T(2,128)}', space=vmem, size = 0x400, scoped, tag = 'scratch operand']
  #allocation5 [shape = 'f32[2,32]{1,0:T(2,128)}', space=vmem, size = 0x400, scoped, tag = 'scratch operand']
  #allocation6 [shape = 'f32[1]{0:T(128)S(6)}', space=smem, size = 0x200, scoped, tag = 'scoped memory for tpu_custom_call.1']
  %s0 = inlined_call_operand.<no memory space> [shape: f32[1], index: 0, kind: input, shape index: {}]
  %s1 = inlined_call_operand.hbm [shape: f32[2,8,32], index: 1, kind: input, shape index: {}]
  %s2 = inlined_call_operand.hbm [shape: f32[32,32], index: 2, kind: input, shape index: {}]
  %s3 = inlined_call_operand.vmem [shape: f32[1,32], index: 3, kind: input, shape index: {}]
  %s4 = inlined_call_operand.vmem [shape: f32[1,32], index: 4, kind: input, shape index: {}]
  %s5 = inlined_call_operand.hbm [shape: f32[2,1,128], index: 5, kind: output, shape index: {}]
  %s6 = sld [smem:[#allocation0]]
  $region46: #{tpu_custom_call.1} parent=0
    _
  %s8 = ssub.s32 1, %s6
  %s9 = scalar_select 0, %s8, %s6
  %10 = sst [smem:[#allocation6]] %s0
  $region1: #{tpu_custom_call.1} parent=0
    #allocation7 [shape = 'u8[8192]{0}', space=vmem, size = 0x2000, scoped, tag = 'input window, operand 1, single buffered']
    #allocation8 [shape = 's32[1]{0}', space=sflag, size = 0x4, scoped, tag = 'scoped memory for tpu_custom_call.1']
    #allocation9 [shape = 's32[1]{0}', space=sflag, size = 0x4, scoped, tag = 'scoped memory for tpu_custom_call.1']
    #allocation10 [shape = 'u8[16384]{0}', space=vmem, size = 0x4000, scoped, tag = 'input window, operand 2, single buffered']
    #allocation11 [shape = 's32[1]{0}', space=sflag, size = 0x4, scoped, tag = 'scoped memory for tpu_custom_call.1']
    #allocation12 [shape = 'u8[1024]{0}', space=vmem, size = 0x400, scoped, tag = 'output window, operand 0, single buffered']
    %11 = vsyncpa [#allocation8], 0
    %12 = vsyncpa [#allocation11], 0
    %13 = vsyncpa [#allocation9], 0
    // Predicated region
    $region2: #{tpu_custom_call.1} parent=1 // pred_check
      _
    $region3: #{tpu_custom_call.1} parent=1 // pred_check_branch
      %15 = sbr.rel (0) target = $region5
    $region4: #{tpu_custom_call.1} parent=1 // pred_region
      _
    $region5: #{tpu_custom_call.1} parent=1 // pred_fallthru
      _
    // Predicated region
    $region6: #{tpu_custom_call.1} parent=1 // pred_check
      _
    $region7: #{tpu_custom_call.1} parent=1 // pred_check_branch
      %17 = sbr.rel (0) target = $region9
    $region8: #{tpu_custom_call.1} parent=1 // pred_region
      %s19 = ssub.s32 256, 256
      %20 = vsyncadd [#allocation8], %s19
      %s21 = sshll.u32 [#allocation7], 4
      %s22 = int_to_ptr.vmem [resolvable:$true] %s21
      %27 = dma.hbm_to_vmem [thread:$0]  %s1, 256, %s22, [#allocation8], 128, 128, 8
    $region9: #{tpu_custom_call.1} parent=1 // pred_fallthru
      _
    // Predicated region
    $region10: #{tpu_custom_call.1} parent=1 // pred_check
      _
    $region11: #{tpu_custom_call.1} parent=1 // pred_check_branch
      %29 = sbr.rel (0) target = $region13
    $region12: #{tpu_custom_call.1} parent=1 // pred_region
      %s31 = ssub.s32 512, 512
      %32 = vsyncadd [#allocation11], %s31
      %s33 = sshll.u32 [#allocation10], 4
      %s34 = int_to_ptr.vmem [resolvable:$true] %s33
      %39 = dma.hbm_to_vmem [thread:$0]  %s2, 512, %s34, [#allocation11], 128, 128, 8
    $region13: #{tpu_custom_call.1} parent=1 // pred_fallthru
      _
    // Predicated region
    $region14: #{tpu_custom_call.1} parent=1 // pred_check
      _
    $region15: #{tpu_custom_call.1} parent=1 // pred_check_branch
      %41 = sbr.rel (0) target = $region17
    $region16: #{tpu_custom_call.1} parent=1 // pred_region
      _
    $region17: #{tpu_custom_call.1} parent=1 // pred_fallthru
      _
    // Predicated region
    $region18: #{tpu_custom_call.1} parent=1 // pred_check
      _
    $region19: #{tpu_custom_call.1} parent=1 // pred_check_branch
      %43 = sbr.rel (0) target = $region21
    $region20: #{tpu_custom_call.1} parent=1 // pred_region
      _
    $region21: #{tpu_custom_call.1} parent=1 // pred_fallthru
      _
    // Predicated region
    $region22: #{tpu_custom_call.1} parent=1 // pred_check
      _
    $region23: #{tpu_custom_call.1} parent=1 // pred_check_branch
      %45 = sbr.rel (0) target = $region25
    $region24: #{tpu_custom_call.1} parent=1 // pred_region
      %46 = dma.done [#allocation8], 256
    $region25: #{tpu_custom_call.1} parent=1 // pred_fallthru
      _
    // Predicated region
    $region26: #{tpu_custom_call.1} parent=1 // pred_check
      _
    $region27: #{tpu_custom_call.1} parent=1 // pred_check_branch
      %48 = sbr.rel (0) target = $region29
    $region28: #{tpu_custom_call.1} parent=1 // pred_region
      %49 = dma.done [#allocation11], 512
    $region29: #{tpu_custom_call.1} parent=1 // pred_fallthru
      _
    %p50 = scmp.eq.s32.totalorder 0, 0
    // Predicated region
    $region30: #{tpu_custom_call.1} parent=1 // pred_check
      %p51 = pneg %p50
    $region31: #{tpu_custom_call.1} parent=1 // pred_check_branch
      %53 = sbr.rel (%p51) target = $region33
    $region32: #{tpu_custom_call.1} parent=1 // pred_region
      %vm54 = vcmask 254976
      %55 = vst.msk [vmem:[#allocation2] sm:$0x3] %vm54, 0.0
      %vm56 = vcmask 1024
      %57 = vst.msk [vmem:[#allocation3] sm:$0x3] %vm56, 0.0
      %58 = vst.msk [vmem:[#allocation4] sm:$0x3] %vm54, 0.0
      %59 = vst.msk [vmem:[#allocation5] sm:$0x3] %vm54, -inf
    $region33: #{tpu_custom_call.1} parent=1 // pred_fallthru
      _
    %v60 = vld [vmem:[#allocation7] sm:$0xff]
    %v61 = vld [vmem:[#allocation7 + $0x8] sm:$0xff]
    %v62 = vld [vmem:[%s4] sm:$0x1]
    %v64 = vlaneseq
    %v65 = vshrl.u32 %v64, 7
    %v66 = vsub.s32 0, %v65
    %v67 = vrot.slane %v62, %v66
    %v69 = vmul.f32 %v60, %v67
    %v70 = vmul.f32 %v61, %v67
    %vm71 = vcmask 261120
    %v72 = vsel %vm71, %v69, 0.0
    %73 = vadd.xlane.f32.xlu0 %v72
    %v74 = vpop.xlane.xlu0 %73
    %v75 = vsel %vm71, %v70, 0.0
    %76 = vadd.xlane.f32.xlu0 %v75
    %v77 = vpop.xlane.xlu0 %76
    %s78 = sld [smem:[#allocation6]]
    %v79 = vsub.f32 0.0, %v74
    %v80 = vsub.f32 0.0, %v77
    %v81 = vmul.f32 %v79, 1.442695
    %v82 = vpow.pop %v81
    %v83 = vmul.f32 %v80, 1.442695
    %v84 = vpow.pop %v83
    %v85 = vstv %s78
    %v86 = vmul.f32 %v85, %v82
    %v87 = vmul.f32 %v85, %v84
    %v88 = vadd.f32 %v86, 1.0
    %v89 = vadd.f32 %v87, 1.0
    %v90 = vrcp.pop %v88
    %v91 = vrcp.pop %v89
    %v92 = vld [vmem:[#allocation2] sm:$0x3]
    %v93 = vmul.f32 %v60, %v90
    %v94 = vmul.f32 %v61, %v91
    %v95 = vsel %vm71, %v93, 0.0
    %v96 = vrot.slane %v95, 4
    %v97 = vadd.f32 %v95, %v96
    %v98 = vrot.slane %v97, 2
    %v99 = vadd.f32 %v97, %v98
    %v100 = vrot.slane %v99, 1
    %v101 = vadd.f32 %v99, %v100
    %v102 = vsel %vm71, %v94, 0.0
    %v103 = vrot.slane %v102, 4
    %v104 = vadd.f32 %v102, %v103
    %v105 = vrot.slane %v104, 2
    %v106 = vadd.f32 %v104, %v105
    %v107 = vrot.slane %v106, 1
    %v108 = vadd.f32 %v106, %v107
    %vm111 = vcmask 1041409
    %v112 = vsel %vm111, %v108, %v101
    %v114 = vadd.f32 %v92, %v112
    %vm115 = vcmask 254976
    %116 = vst.msk [vmem:[#allocation2] sm:$0x3] %vm115, %v114
    %v117 = vld [vmem:[#allocation3] sm:$0x3]
    %v118 = vrot.slane %v90, 4
    %v119 = vadd.f32 %v90, %v118
    %v120 = vrot.slane %v119, 2
    %v121 = vadd.f32 %v119, %v120
    %v122 = vrot.slane %v121, 1
    %v123 = vadd.f32 %v121, %v122
    %v124 = vrot.slane %v91, 4
    %v125 = vadd.f32 %v91, %v124
    %v126 = vrot.slane %v125, 2
    %v127 = vadd.f32 %v125, %v126
    %v128 = vrot.slane %v127, 1
    %v129 = vadd.f32 %v127, %v128
    %v132 = vsel %vm111, %v129, %v123
    %v134 = vadd.f32 %v117, %v132
    %vm135 = vcmask 1024
    %136 = vst.msk [vmem:[#allocation3] sm:$0x3] %vm135, %v134
    %v137 = vld [vmem:[#allocation4] sm:$0x3]
    %v138 = vsel %vm71, %v60, 0.0
    %v139 = vrot.slane %v138, 4
    %v140 = vadd.f32 %v138, %v139
    %v141 = vrot.slane %v140, 2
    %v142 = vadd.f32 %v140, %v141
    %v143 = vrot.slane %v142, 1
    %v144 = vadd.f32 %v142, %v143
    %v145 = vsel %vm71, %v61, 0.0
    %v146 = vrot.slane %v145, 4
    %v147 = vadd.f32 %v145, %v146
    %v148 = vrot.slane %v147, 2
    %v149 = vadd.f32 %v147, %v148
    %v150 = vrot.slane %v149, 1
    %v151 = vadd.f32 %v149, %v150
    %v154 = vsel %vm111, %v151, %v144
    %v156 = vadd.f32 %v137, %v154
    %157 = vst.msk [vmem:[#allocation4] sm:$0x3] %vm115, %v156
    %v158 = vld [vmem:[#allocation5] sm:$0x3]
    %v159 = vsel %vm71, %v60, -inf
    %v160 = vrot.slane %v159, 4
    %v161 = vmax.f32 %v159, %v160
    %v162 = vrot.slane %v161, 2
    %v163 = vmax.f32 %v161, %v162
    %v164 = vrot.slane %v163, 1
    %v165 = vmax.f32 %v163, %v164
    %v166 = vsel %vm71, %v61, -inf
    %v167 = vrot.slane %v166, 4
    %v168 = vmax.f32 %v166, %v167
    %v169 = vrot.slane %v168, 2
    %v170 = vmax.f32 %v168, %v169
    %v171 = vrot.slane %v170, 1
    %v172 = vmax.f32 %v170, %v171
    %v175 = vsel %vm111, %v172, %v165
    %v177 = vmax.f32 %v158, %v175
    %178 = vst.msk [vmem:[#allocation5] sm:$0x3] %vm115, %v177
    // Predicated region
    $region34: #{tpu_custom_call.1} parent=1 // pred_check
      %p179 = pneg %p50
    $region35: #{tpu_custom_call.1} parent=1 // pred_check_branch
      %181 = sbr.rel (%p179) target = $region37
    $region36: #{tpu_custom_call.1} parent=1 // pred_region
      %v182 = vld [vmem:[#allocation2] sm:$0x3]
      %v183 = vld [vmem:[#allocation10] sm:$0xff]
      %v184 = vld [vmem:[#allocation10 + $0x8] sm:$0xff]
      %v185 = vld [vmem:[#allocation10 + $0x10] sm:$0xff]
      %v186 = vld [vmem:[#allocation10 + $0x18] sm:$0xff]
      %v187 = vld [vmem:[#allocation3] sm:$0x3]
      %v188 = vld [vmem:[%s3] sm:$0x1]
      %190 = vset.pattern.permute.xlu0 0
      %191 = vperm.xlu0 %190, %v187
      %v192 = vpop.permute.xlu0 %191
      %v195 = vlaneseq
      %v196 = vshrl.u32 %v195, 7
      %v197 = vsub.s32 0, %v196
      %v198 = vrot.slane %v188, %v197
      %v200 = vmul.f32 %v192, %v198
      %v202 = vsel %vm71, %v182, 0
      %204 = vmatprep.subr.mxu0 0.0
      %205 = vmatpush1.msra.mxu0 %v183
      %206 = vmatprep.subr.mxu0 0.0
      %207 = vmatpush1.msra.mxu0 %v184
      %208 = vmatprep.subr.mxu0 0.0
      %209 = vmatpush1.msra.mxu0 %v185
      %210 = vmatprep.subr.mxu0 0.0
      %211 = vmatpush1.msra.mxu0 %v186
      %212 = vmatprep.subr.mxu0 0.0
      %213 = vmatpush1.msra.mxu0 0.0
      %214 = vmatprep.subr.mxu0 0.0
      %215 = vmatpush1.msra.mxu0 0.0
      %216 = vmatprep.subr.mxu0 0.0
      %217 = vmatpush1.msra.mxu0 0.0
      %218 = vmatprep.subr.mxu0 0.0
      %219 = vmatpush1.msra.mxu0 0.0
      %220 = vmatprep.subr.mxu0 0.0
      %221 = vmatpush1.msra.mxu0 0.0
      %222 = vmatprep.subr.mxu0 0.0
      %223 = vmatpush1.msra.mxu0 0.0
      %224 = vmatprep.subr.mxu0 0.0
      %225 = vmatpush1.msra.mxu0 0.0
      %226 = vmatprep.subr.mxu0 0.0
      %227 = vmatpush1.msra.mxu0 0.0
      %228 = vmatprep.subr.mxu0 0.0
      %229 = vmatpush1.msra.mxu0 0.0
      %230 = vmatprep.subr.mxu0 0.0
      %231 = vmatpush1.msra.mxu0 0.0
      %232 = vmatprep.subr.mxu0 0.0
      %233 = vmatpush1.msra.mxu0 0.0
      %234 = vmatprep.subr.mxu0 0.0
      %235 = vmatpush1.msra.mxu0 0.0
      %236 = vmatprep.subr.mxu0 0.0
      %237 = vmatpush1.msra.mxu0 0.0
      %238 = vmatprep.subr.mxu0 0.0
      %239 = vmatpush1.msra.mxu0 0.0
      %240 = vmatprep.subr.mxu0 0.0
      %241 = vmatpush1.msra.mxu0 0.0
      %242 = vmatprep.subr.mxu0 0.0
      %243 = vmatpush1.msra.mxu0 0.0
      %244 = vmatprep.subr.mxu0 0.0
      %245 = vmatpush1.msra.mxu0 0.0
      %246 = vmatprep.subr.mxu0 0.0
      %247 = vmatpush1.msra.mxu0 0.0
      %248 = vmatprep.subr.mxu0 0.0
      %249 = vmatpush1.msra.mxu0 0.0
      %250 = vmatprep.subr.mxu0 0.0
      %251 = vmatpush1.msra.mxu0 0.0
      %252 = vmatprep.subr.mxu0 0.0
      %253 = vmatpush1.msra.mxu0 0.0
      %254 = vmatprep.subr.mxu0 0.0
      %255 = vmatpush1.msra.mxu0 0.0
      %256 = vmatprep.subr.mxu0 0.0
      %257 = vmatpush1.msra.mxu0 0.0
      %258 = vmatprep.subr.mxu0 0.0
      %259 = vmatpush1.msra.mxu0 0.0
      %260 = vmatprep.subr.mxu0 0.0
      %261 = vmatpush1.msra.mxu0 0.0
      %262 = vmatprep.subr.mxu0 0.0
      %263 = vmatpush1.msra.mxu0 0.0
      %264 = vmatprep.subr.mxu0 0.0
      %265 = vmatpush1.msra.mxu0 0.0
      %266 = vmatprep.subr.mxu0 0.0
      %267 = vmatpush1.msra.mxu0 0.0
      %268 = vmatprep.mubr.f32.mxu0 0.0
      %269 = vmatmul.mubr.f32.gmra.mrb[0].mxu0 %v202
      %v270 = vpop.f32.mrb[0].mxu0
      %v271 = vadd.f32 %v200, %v270
      %v272 = vpop.f32.mrb[0].mxu0
      %273 = vdwg.mxu0
      %v274 = vld [vmem:[#allocation4] sm:$0x3]
      %v275 = vld [vmem:[#allocation5] sm:$0x3]
      %v276 = vmul.f32 %v274, 0.125
      %278 = vrot.lane.b32.xlu0 %v274, 32
      %v279 = vpop.permute.xlu0 %278
      %282 = vrot.lane.b32.xlu0 %v275, 64
      %v283 = vpop.permute.xlu0 %282
      %286 = vrot.lane.b32.xlu0 %v276, 96
      %v287 = vpop.permute.xlu0 %286
      %v289 = vsel %vm71, %v271, %v279
      %vm290 = vcmask 523264
      %v291 = vsel %vm290, %v289, %v283
      %vm292 = vcmask 785408
      %v293 = vsel %vm292, %v291, %v287
      %v296 = vunpack.c.l.s4 1966171168
      %v297 = vunpack.c.0.s8 %v296
      %v298 = vlaneseq
      %v299 = vshrl.u32 %v298, 7
      %v300 = vsub.s32 %v297, %v299
      %v301 = vrot.slane %v293, %v300
      %v302 = vcombine.high %v301, %v301
      %v304 = vunpack.c.l.s4 1966171168
      %v305 = vunpack.c.0.s8 %v304
      %v306 = vlaneseq
      %v307 = vshrl.u32 %v306, 7
      %v308 = vsub.s32 %v305, %v307
      %v309 = vrot.slane %v301, %v308
      %v311 = vunpack.c.l.s4 1966171168
      %v312 = vunpack.c.0.s8 %v311
      %v313 = vlaneseq
      %v314 = vshrl.u32 %v313, 7
      %v315 = vsub.s32 %v312, %v314
      %v316 = vrot.slane %v302, %v315
      %319 = vst [vmem:[#allocation12] sm:$0x1] %v309
      %320 = vst [vmem:[#allocation12 + $0x1] sm:$0x1] %v316
    $region37: #{tpu_custom_call.1} parent=1 // pred_fallthru
      _
    // Predicated region
    $region38: #{tpu_custom_call.1} parent=1 // pred_check
      _
    $region39: #{tpu_custom_call.1} parent=1 // pred_check_branch
      %322 = sbr.rel (0) target = $region41
    $region40: #{tpu_custom_call.1} parent=1 // pred_region
      %s324 = ssub.s32 32, 32
      %325 = vsyncadd [#allocation9], %s324
      %s326 = sshll.u32 [#allocation12], 4
      %s327 = int_to_ptr.vmem [resolvable:$true] %s326
      %332 = dma.vmem_to_hbm [thread:$0]  %s327, 32, %s5, [#allocation9], 16, 16, 1
    $region41: #{tpu_custom_call.1} parent=1 // pred_fallthru
      _
    // Predicated region
    $region42: #{tpu_custom_call.1} parent=1 // pred_check
      _
    $region43: #{tpu_custom_call.1} parent=1 // pred_check_branch
      %334 = sbr.rel (0) target = $region45
    $region44: #{tpu_custom_call.1} parent=1 // pred_region
      %335 = dma.done [#allocation9], 32
    $region45: #{tpu_custom_call.1} parent=1 // pred_fallthru
      _
    %336 = vsyncpa [#allocation8], 1
    %337 = vsyncpa [#allocation11], 1
    %338 = vsyncpa [#allocation9], 1

</llo_original>
